<compile_context>
chip_gen: v7x
topology: tpu7x:2x2x1
jax: 0.10.0
libtpu: 0.0.40
codegen_flags: <defaults>
</compile_context>

<pallas_src>
import functools

import jax
import jax.numpy as jnp
import numpy as np
from jax import lax
from jax.experimental import pallas as pl
from jax.experimental.pallas import tpu as pltpu

# Slab row layout.  Row 0 carries the current (weighted) losses on input and
# the aggregated loss (broadcast over lanes, read back at [0, 0]) on output.
ROW_LOSS, ROW_INIT, ROW_PREV, ROW_LMBDA = 0, 1, 2, 3
NUM_ROWS = 4

_MURMUR_C1 = 0x85EBCA6B - (1 << 32)   # murmur3 finalizer constants as int32
_MURMUR_C2 = 0xC2B2AE35 - (1 << 32)


def _bernoulli_threshold(beta):
    """Integer threshold so that P(u24 < thresh) == beta for u24 ~ U[0, 2^24)."""
    return max(0, min(1 << 24, int(round(float(beta) * (1 << 24)))))


def _rho_keep_bit(step_i32, seed_i32, thresh):
    """murmur3 finalizer of (seed + step) on the scalar core -> bool, P = thresh/2^24."""
    # TODO(synk): torch.bernoulli's host RNG stream has no Pallas equivalent;
    # this deterministic counter hash has the same Bernoulli(beta) marginal.
    x = step_i32 + jnp.int32(seed_i32)
    x = x ^ lax.shift_right_logical(x, jnp.int32(16))
    x = x * jnp.int32(_MURMUR_C1)
    x = x ^ lax.shift_right_logical(x, jnp.int32(13))
    x = x * jnp.int32(_MURMUR_C2)
    x = x ^ lax.shift_right_logical(x, jnp.int32(16))
    u24 = lax.shift_right_logical(x, jnp.int32(8))        # uniform in [0, 2^24)
    return u24 < jnp.int32(thresh)


def _rho_keep_bit_host(step, seed32, thresh):
    """Exact Python-int replica of _rho_keep_bit (for the host-side reference)."""
    m = 0xFFFFFFFF
    x = (seed32 + step) & m
    x ^= x >> 16
    x = (x * 0x85EBCA6B) & m
    x ^= x >> 13
    x = (x * 0xC2B2AE35) & m
    x ^= x >> 16
    return 1.0 if (x >> 8) < thresh else 0.0


# -----------------------------------------------------------------------------
# Pallas kernel: one (4, N) state slab in, one (4, N) state slab out (aliased).
# -----------------------------------------------------------------------------
def _relobralo_kernel(alpha, tau, eps, num_losses, seed_i32, thresh,
                      step_ref,      # SMEM i32[1]: current step
                      slab_ref,      # VMEM (4, N) f32: [losses, init, prev, lmbda]
                      out_ref):      # VMEM (4, N) f32: [loss, init, prev, lmbda]
    step = step_ref[0]
    losses = slab_ref[ROW_LOSS:ROW_LOSS + 1, :]            # (1, N)

    @pl.when(step == 0)
    def _():
        # Step 0: plain sum; initialize loss-history rows; lmbda_ema unchanged.
        loss0 = jnp.sum(losses, axis=1, keepdims=True)     # (1, 1)
        out_ref[ROW_LOSS:ROW_LOSS + 1, :] = jnp.broadcast_to(loss0, (1, num_losses))
        out_ref[ROW_INIT:ROW_INIT + 1, :] = losses
        out_ref[ROW_PREV:ROW_PREV + 1, :] = losses
        out_ref[ROW_LMBDA:ROW_LMBDA + 1, :] = slab_ref[ROW_LMBDA:ROW_LMBDA + 1, :]

    @pl.when(step != 0)
    def _():
        init_l = slab_ref[ROW_INIT:ROW_INIT + 1, :]
        prev_l = slab_ref[ROW_PREV:ROW_PREV + 1, :]
        lmbda = slab_ref[ROW_LMBDA:ROW_LMBDA + 1, :]

        # EUP reciprocals instead of VALU divides.  The max-normalizer reuses
        # the eps'd reciprocal: <= ~1e-8 relative deviation from the PyTorch
        # reference's no-eps normalizer, which cancels in the softmax anyway.
        inv_prev = pl.reciprocal(tau * prev_l + eps)
        inv_init = pl.reciprocal(tau * init_l + eps)
        z_prev = losses * inv_prev
        z_init = losses * inv_init
        e_prev = jnp.exp(z_prev - jnp.max(z_prev, axis=1, keepdims=True))
        e_init = jnp.exp(z_init - jnp.max(z_init, axis=1, keepdims=True))
        lmbda_prev = e_prev * (float(num_losses) * pl.reciprocal(
            jnp.sum(e_prev, axis=1, keepdims=True) + eps, approx=True))
        lmbda_init = e_init * (float(num_losses) * pl.reciprocal(
            jnp.sum(e_init, axis=1, keepdims=True) + eps, approx=True))

        # Random-lookback draw on the scalar core.  rho in {0,1}, so the EMA
        # term alpha*(rho*lmbda + (1-rho)*lmbda_init) is exactly a select.
        keep = _rho_keep_bit(step, seed_i32, thresh)
        new_lmbda = (jnp.float32(alpha) * jnp.where(keep, lmbda, lmbda_init)
                     + jnp.float32(1.0 - alpha) * lmbda_prev)
        loss = jnp.sum(new_lmbda * losses, axis=1, keepdims=True)   # (1, 1)

        out_ref[ROW_LOSS:ROW_LOSS + 1, :] = jnp.broadcast_to(loss, (1, num_losses))
        out_ref[ROW_INIT:ROW_INIT + 1, :] = init_l        # only set at step 0
        out_ref[ROW_PREV:ROW_PREV + 1, :] = losses        # prev_losses <- losses
        out_ref[ROW_LMBDA:ROW_LMBDA + 1, :] = new_lmbda


# -----------------------------------------------------------------------------
# Functional step builder: stacking + weighting + pallas_call + step increment.
# -----------------------------------------------------------------------------
def _build_relobralo_step(num_losses, alpha, beta, tau, eps, seed):
    thresh = _bernoulli_threshold(beta)
    seed32 = int(seed) & 0xFFFFFFFF
    seed_i32 = seed32 - (1 << 32) if seed32 >= (1 << 31) else seed32

    kernel = functools.partial(_relobralo_kernel, float(alpha), float(tau),
                               float(eps), int(num_losses), seed_i32, thresh)
    slab_sd = jax.ShapeDtypeStruct((NUM_ROWS, num_losses), jnp.float32)
    call = pl.pallas_call(
        kernel,
        out_shape=slab_sd,
        in_specs=[pl.BlockSpec(memory_space=pltpu.MemorySpace.SMEM),   # step
                  pl.BlockSpec(memory_space=pltpu.MemorySpace.VMEM)],  # state slab
        out_specs=pl.BlockSpec(memory_space=pltpu.MemorySpace.VMEM),
        input_output_aliases={1: 0},          # state slab updated in place
    )

    def step_fn(step, loss_values, w_vec, state):
        """Pure functional ReLoBRaLo step - embed directly in a training jit.

        Returns (loss_scalar, lmbda_ema[N], new_state_slab[4,N], next_step).
        """
        step = jnp.asarray(step, jnp.int32).reshape((1,))
        stacked = jnp.stack([jnp.asarray(v, jnp.float32).reshape(())
                             for v in loss_values])
        stacked = stacked * w_vec                       # static per-term weights
        slab = state.at[ROW_LOSS, :].set(stacked)
        slab = call(step, slab)
        loss = slab[ROW_LOSS, 0]
        lmbda = slab[ROW_LMBDA, :]
        return loss, lmbda, slab, step[0] + 1

    return step_fn


class RelobraloPallas:
    """Functional JAX/Pallas port of neuralop's Relobralo loss aggregator.

    All state (init_losses, prev_losses, lmbda_ema and the step counter) lives
    on device in a single (4, num_losses) slab that the Pallas kernel updates
    in place; every __call__ is one donated jitted dispatch.  For maximum
    throughput, embed `self.step_fn` (pure) inside your own training-step jit
    instead of calling the class per step.
    """

    def __init__(self, num_losses, alpha=0.95, beta=0.99, tau=1.0, eps=1e-8,
                 weights=None, seed=0):
        self.num_losses = int(num_losses)
        self.alpha, self.beta, self.tau, self.eps = alpha, beta, tau, eps
        self.weights = weights
        self.seed = int(seed)
        self.step_fn = _build_relobralo_step(self.num_losses, alpha, beta,
                                             tau, eps, self.seed)
        self._step_jit = jax.jit(self.step_fn, donate_argnums=(3,))
        # Slab rows: [losses / loss, init_losses, prev_losses, lmbda_ema].
        self.state = jnp.concatenate(
            [jnp.zeros((3, self.num_losses), jnp.float32),
             jnp.ones((1, self.num_losses), jnp.float32)], axis=0)
        self._step = jnp.zeros((), jnp.int32)      # device-resident step counter
        self._w_cache = {}

    @property
    def lmbda_ema(self):
        return self.state[ROW_LMBDA]

    def _weights_vec(self, keys):
        # Cached per key-ordering so re-ordered dicts never misalign weights.
        if keys not in self._w_cache:
            if self.weights is None:
                w = [1.0] * self.num_losses
            else:
                w = [float(self.weights.get(k, 1.0)) for k in keys]
            self._w_cache[keys] = jnp.asarray(w, jnp.float32)
        return self._w_cache[keys]

    def __call__(self, losses, step=None):
        keys = tuple(losses.keys())
        vals = tuple(losses.values())
        w_vec = self._weights_vec(keys)
        step_dev = self._step if step is None else jnp.asarray(step, jnp.int32)
        loss, lmbda, new_state, next_step = self._step_jit(
            step_dev, vals, w_vec, self.state)
        # Commit updated device state (mirrors PyTorch in-place buffer updates).
        self.state = new_state
        self._step = next_step
        return loss, lmbda


# -----------------------------------------------------------------------------
# Host-side reference (same math as the PyTorch module, same rho hash)
# -----------------------------------------------------------------------------
def _reference_step(losses_vec, init_l, prev_l, lmbda, step, rho,
                    alpha, tau, eps, n):
    losses_vec = np.asarray(losses_vec, np.float64)
    if step == 0:
        return float(np.sum(losses_vec)), lmbda, losses_vec.copy(), losses_vec.copy()
    norm_prev = np.max(losses_vec / (tau * prev_l))
    norm_init = np.max(losses_vec / (tau * init_l))
    lmbda_prev = np.exp(losses_vec / (tau * prev_l + eps) - norm_prev)
    lmbda_init = np.exp(losses_vec / (tau * init_l + eps) - norm_init)
    lmbda_prev = lmbda_prev * (n / (np.sum(lmbda_prev) + eps))
    lmbda_init = lmbda_init * (n / (np.sum(lmbda_init) + eps))
    new_lmbda = (alpha * (rho * lmbda + (1.0 - rho) * lmbda_init)
                 + (1.0 - alpha) * lmbda_prev)
    loss = float(np.sum(new_lmbda * losses_vec))
    return loss, new_lmbda, init_l, losses_vec.copy()


if __name__ == "__main__":
    num_losses = 4
    names = ["data_loss", "physics_loss", "bc_loss", "ic_loss"]
    alpha, beta, tau, eps, seed = 0.95, 0.99, 1.0, 1e-8, 0

    key = jax.random.PRNGKey(0)
    keys = jax.random.split(key, 5)
    step_vals = [jax.random.uniform(k, (num_losses,), jnp.float32, 0.1, 2.0)
                 for k in keys]

    agg = RelobraloPallas(num_losses=num_losses, alpha=alpha, beta=beta,
                          tau=tau, eps=eps, seed=seed)
    thresh = _bernoulli_threshold(beta)
    seed32 = seed & 0xFFFFFFFF

    # Independent host-side reference state.
    ref_init = np.zeros((num_losses,), np.float64)
    ref_prev = np.zeros((num_losses,), np.float64)
    ref_lmbda = np.ones((num_losses,), np.float64)

    results = []
    for step, vals in enumerate(step_vals):
        losses = {nm: vals[i] for i, nm in enumerate(names)}
        loss, lmbda = agg(losses)                # uses the on-device step counter
        results.append((loss, lmbda))

        rho = _rho_keep_bit_host(step, seed32, thresh)
        ref_loss, ref_lmbda, ref_init, ref_prev = _reference_step(
            np.asarray(vals, np.float64), ref_init, ref_prev, ref_lmbda,
            step, rho, alpha, tau, eps, num_losses)
        np.testing.assert_allclose(np.asarray(loss), ref_loss,
                                   rtol=5e-3, atol=5e-3)
        np.testing.assert_allclose(np.asarray(lmbda), np.asarray(ref_lmbda),
                                   rtol=5e-3, atol=5e-3)

    jax.block_until_ready(results)
    print("KERNEL_OK")
</pallas_src>

<mosaic_0001>
module attributes {stable_mosaic.version = 11 : i64} {
  func.func @_relobralo_kernel(%arg0: memref<1xi32, #tpu.memory_space<smem>>, %arg1: memref<4x4xf32, #tpu.memory_space<vmem>>, %arg2: memref<4x4xf32, #tpu.memory_space<vmem>>) attributes {dimension_semantics = [], scalar_prefetch = 0 : i64, scratch_operands = 0 : i64, tpu.core_type = #tpu.core_type<tc>} {
    %c0 = arith.constant 0 : index
    %0 = memref.load %arg0[%c0] : memref<1xi32, #tpu.memory_space<smem>>
    %c0_0 = arith.constant 0 : index
    %c0_1 = arith.constant 0 : index
    %1 = vector.load %arg1[%c0_0, %c0_1] : memref<4x4xf32, #tpu.memory_space<vmem>>, vector<1x4xf32>
    %c0_i32 = arith.constant 0 : i32
    %2 = arith.cmpi eq, %0, %c0_i32 : i32
    %3 = arith.extui %2 : i1 to i32
    %c0_i32_2 = arith.constant 0 : i32
    %4 = arith.cmpi ne, %3, %c0_i32_2 : i32
    scf.if %4 {
      %cst = arith.constant dense<0.000000e+00> : vector<1xf32>
      %8 = vector.multi_reduction <add>, %1, %cst [1] : vector<1x4xf32> to vector<1xf32>
      %9 = vector.shape_cast %8 : vector<1xf32> to vector<1x1xf32>
      %10 = vector.shape_cast %9 : vector<1x1xf32> to vector<1x1xf32>
      %11 = vector.broadcast %10 : vector<1x1xf32> to vector<1x4xf32>
      %c0_5 = arith.constant 0 : index
      %c0_6 = arith.constant 0 : index
      %12 = vector.load %arg2[%c0_5, %c0_6] : memref<4x4xf32, #tpu.memory_space<vmem>>, vector<1x4xf32>
      tpu.vector_store %arg2[%c0_5, %c0_6], %11 {strides = array<i32>} : memref<4x4xf32, #tpu.memory_space<vmem>>, vector<1x4xf32>,
      %c1 = arith.constant 1 : index
      %c0_7 = arith.constant 0 : index
      %13 = vector.load %arg2[%c1, %c0_7] : memref<4x4xf32, #tpu.memory_space<vmem>>, vector<1x4xf32>
      tpu.vector_store %arg2[%c1, %c0_7], %1 {strides = array<i32>} : memref<4x4xf32, #tpu.memory_space<vmem>>, vector<1x4xf32>,
      %c2 = arith.constant 2 : index
      %c0_8 = arith.constant 0 : index
      %14 = vector.load %arg2[%c2, %c0_8] : memref<4x4xf32, #tpu.memory_space<vmem>>, vector<1x4xf32>
      tpu.vector_store %arg2[%c2, %c0_8], %1 {strides = array<i32>} : memref<4x4xf32, #tpu.memory_space<vmem>>, vector<1x4xf32>,
      %c3 = arith.constant 3 : index
      %c0_9 = arith.constant 0 : index
      %15 = vector.load %arg1[%c3, %c0_9] : memref<4x4xf32, #tpu.memory_space<vmem>>, vector<1x4xf32>
      %c3_10 = arith.constant 3 : index
      %c0_11 = arith.constant 0 : index
      %16 = vector.load %arg2[%c3_10, %c0_11] : memref<4x4xf32, #tpu.memory_space<vmem>>, vector<1x4xf32>
      tpu.vector_store %arg2[%c3_10, %c0_11], %15 {strides = array<i32>} : memref<4x4xf32, #tpu.memory_space<vmem>>, vector<1x4xf32>,
    } else {
    }
    %c0_i32_3 = arith.constant 0 : i32
    %5 = arith.cmpi ne, %0, %c0_i32_3 : i32
    %6 = arith.extui %5 : i1 to i32
    %c0_i32_4 = arith.constant 0 : i32
    %7 = arith.cmpi ne, %6, %c0_i32_4 : i32
    scf.if %7 {
      %c1 = arith.constant 1 : index
      %c0_5 = arith.constant 0 : index
      %8 = vector.load %arg1[%c1, %c0_5] : memref<4x4xf32, #tpu.memory_space<vmem>>, vector<1x4xf32>
      %c2 = arith.constant 2 : index
      %c0_6 = arith.constant 0 : index
      %9 = vector.load %arg1[%c2, %c0_6] : memref<4x4xf32, #tpu.memory_space<vmem>>, vector<1x4xf32>
      %c3 = arith.constant 3 : index
      %c0_7 = arith.constant 0 : index
      %10 = vector.load %arg1[%c3, %c0_7] : memref<4x4xf32, #tpu.memory_space<vmem>>, vector<1x4xf32>
      %cst = arith.constant 1.000000e+00 : f32
      %11 = vector.broadcast %cst : f32 to vector<1x4xf32>
      %12 = arith.mulf %11, %9 : vector<1x4xf32>
      %cst_8 = arith.constant 9.99999993E-9 : f32
      %13 = vector.broadcast %cst_8 : f32 to vector<1x4xf32>
      %14 = arith.addf %12, %13 : vector<1x4xf32>
      %15 = tpu.reciprocal %14 : vector<1x4xf32> -> vector<1x4xf32>
      %cst_9 = arith.constant 1.000000e+00 : f32
      %16 = vector.broadcast %cst_9 : f32 to vector<1x4xf32>
      %17 = arith.mulf %16, %8 : vector<1x4xf32>
      %cst_10 = arith.constant 9.99999993E-9 : f32
      %18 = vector.broadcast %cst_10 : f32 to vector<1x4xf32>
      %19 = arith.addf %17, %18 : vector<1x4xf32>
      %20 = tpu.reciprocal %19 : vector<1x4xf32> -> vector<1x4xf32>
      %21 = arith.mulf %1, %15 : vector<1x4xf32>
      %22 = arith.mulf %1, %20 : vector<1x4xf32>
      %cst_11 = arith.constant dense<0xFF800000> : vector<1xf32>
      %23 = vector.multi_reduction <maximumf>, %21, %cst_11 [1] : vector<1x4xf32> to vector<1xf32>
      %24 = vector.shape_cast %23 : vector<1xf32> to vector<1x1xf32>
      %25 = vector.broadcast %24 : vector<1x1xf32> to vector<1x4xf32>
      %26 = arith.subf %21, %25 : vector<1x4xf32>
      %27 = math.exp %26 : vector<1x4xf32>
      %cst_12 = arith.constant dense<0xFF800000> : vector<1xf32>
      %28 = vector.multi_reduction <maximumf>, %22, %cst_12 [1] : vector<1x4xf32> to vector<1xf32>
      %29 = vector.shape_cast %28 : vector<1xf32> to vector<1x1xf32>
      %30 = vector.broadcast %29 : vector<1x1xf32> to vector<1x4xf32>
      %31 = arith.subf %22, %30 : vector<1x4xf32>
      %32 = math.exp %31 : vector<1x4xf32>
      %cst_13 = arith.constant dense<0.000000e+00> : vector<1xf32>
      %33 = vector.multi_reduction <add>, %27, %cst_13 [1] : vector<1x4xf32> to vector<1xf32>
      %34 = vector.shape_cast %33 : vector<1xf32> to vector<1x1xf32>
      %cst_14 = arith.constant 9.99999993E-9 : f32
      %35 = vector.broadcast %cst_14 : f32 to vector<1x1xf32>
      %36 = arith.addf %34, %35 : vector<1x1xf32>
      %37 = tpu.reciprocal %36 {approx = true} : vector<1x1xf32> -> vector<1x1xf32>
      %cst_15 = arith.constant 4.000000e+00 : f32
      %38 = vector.broadcast %cst_15 : f32 to vector<1x1xf32>
      %39 = arith.mulf %38, %37 : vector<1x1xf32>
      %40 = vector.broadcast %39 : vector<1x1xf32> to vector<1x4xf32>
      %41 = arith.mulf %27, %40 : vector<1x4xf32>
      %cst_16 = arith.constant dense<0.000000e+00> : vector<1xf32>
      %42 = vector.multi_reduction <add>, %32, %cst_16 [1] : vector<1x4xf32> to vector<1xf32>
      %43 = vector.shape_cast %42 : vector<1xf32> to vector<1x1xf32>
      %cst_17 = arith.constant 9.99999993E-9 : f32
      %44 = vector.broadcast %cst_17 : f32 to vector<1x1xf32>
      %45 = arith.addf %43, %44 : vector<1x1xf32>
      %46 = tpu.reciprocal %45 {approx = true} : vector<1x1xf32> -> vector<1x1xf32>
      %cst_18 = arith.constant 4.000000e+00 : f32
      %47 = vector.broadcast %cst_18 : f32 to vector<1x1xf32>
      %48 = arith.mulf %47, %46 : vector<1x1xf32>
      %49 = vector.broadcast %48 : vector<1x1xf32> to vector<1x4xf32>
      %50 = arith.mulf %32, %49 : vector<1x4xf32>
      %c0_i32_19 = arith.constant 0 : i32
      %51 = arith.addi %0, %c0_i32_19 : i32
      %c16_i32 = arith.constant 16 : i32
      %52 = arith.shrui %51, %c16_i32 : i32
      %53 = arith.xori %51, %52 : i32
      %c-2048144789_i32 = arith.constant -2048144789 : i32
      %54 = arith.muli %53, %c-2048144789_i32 : i32
      %c13_i32 = arith.constant 13 : i32
      %55 = arith.shrui %54, %c13_i32 : i32
      %56 = arith.xori %54, %55 : i32
      %c-1028477387_i32 = arith.constant -1028477387 : i32
      %57 = arith.muli %56, %c-1028477387_i32 : i32
      %c16_i32_20 = arith.constant 16 : i32
      %58 = arith.shrui %57, %c16_i32_20 : i32
      %59 = arith.xori %57, %58 : i32
      %c8_i32 = arith.constant 8 : i32
      %60 = arith.shrui %59, %c8_i32 : i32
      %c16609444_i32 = arith.constant 16609444 : i32
      %61 = arith.cmpi slt, %60, %c16609444_i32 : i32
      %62 = arith.select %61, %10, %50 : vector<1x4xf32>
      %cst_21 = arith.constant 0.949999988 : f32
      %63 = vector.broadcast %cst_21 : f32 to vector<1x4xf32>
      %64 = arith.mulf %63, %62 : vector<1x4xf32>
      %cst_22 = arith.constant 5.000000e-02 : f32
      %65 = vector.broadcast %cst_22 : f32 to vector<1x4xf32>
      %66 = arith.mulf %65, %41 : vector<1x4xf32>
      %67 = arith.addf %64, %66 : vector<1x4xf32>
      %68 = arith.mulf %67, %1 : vector<1x4xf32>
      %cst_23 = arith.constant dense<0.000000e+00> : vector<1xf32>
      %69 = vector.multi_reduction <add>, %68, %cst_23 [1] : vector<1x4xf32> to vector<1xf32>
      %70 = vector.shape_cast %69 : vector<1xf32> to vector<1x1xf32>
      %71 = vector.shape_cast %70 : vector<1x1xf32> to vector<1x1xf32>
      %72 = vector.broadcast %71 : vector<1x1xf32> to vector<1x4xf32>
      %c0_24 = arith.constant 0 : index
      %c0_25 = arith.constant 0 : index
      %73 = vector.load %arg2[%c0_24, %c0_25] : memref<4x4xf32, #tpu.memory_space<vmem>>, vector<1x4xf32>
      tpu.vector_store %arg2[%c0_24, %c0_25], %72 {strides = array<i32>} : memref<4x4xf32, #tpu.memory_space<vmem>>, vector<1x4xf32>,
      %c1_26 = arith.constant 1 : index
      %c0_27 = arith.constant 0 : index
      %74 = vector.load %arg2[%c1_26, %c0_27] : memref<4x4xf32, #tpu.memory_space<vmem>>, vector<1x4xf32>
      tpu.vector_store %arg2[%c1_26, %c0_27], %8 {strides = array<i32>} : memref<4x4xf32, #tpu.memory_space<vmem>>, vector<1x4xf32>,
      %c2_28 = arith.constant 2 : index
      %c0_29 = arith.constant 0 : index
      %75 = vector.load %arg2[%c2_28, %c0_29] : memref<4x4xf32, #tpu.memory_space<vmem>>, vector<1x4xf32>
      tpu.vector_store %arg2[%c2_28, %c0_29], %1 {strides = array<i32>} : memref<4x4xf32, #tpu.memory_space<vmem>>, vector<1x4xf32>,
      %c3_30 = arith.constant 3 : index
      %c0_31 = arith.constant 0 : index
      %76 = vector.load %arg2[%c3_30, %c0_31] : memref<4x4xf32, #tpu.memory_space<vmem>>, vector<1x4xf32>
      tpu.vector_store %arg2[%c3_30, %c0_31], %67 {strides = array<i32>} : memref<4x4xf32, #tpu.memory_space<vmem>>, vector<1x4xf32>,
    } else {
    }
    return
  }
}

</mosaic_0001>

<llo_original>
// kernel: step_fn.1
$region0: #{step_fn.1}
  #allocation0 [shape = 'u32[]', space=smem, size = 0x4, offset = 0x4, fixed_abs, tag = 'smem constant byte address 0x4 - core index']
  #allocation1 [shape = 'u32[144,128]{1,0:T(1,128)}', space=vmem, size = 0x12000, scoped, tag = 'internal scratch']
  #allocation2 [shape = 's32[1]{0:T(128)S(6)}', space=smem, size = 0x200, scoped, tag = 'scoped memory for step_fn.1']
  %s0 = inlined_call_operand.<no memory space> [shape: s32[1], index: 0, kind: input, shape index: {}]
  %s1 = inlined_call_operand.vmem [shape: f32[4,4], index: 1, kind: input, shape index: {}, may-alias: {1,2}]
  %s2 = inlined_call_operand.vmem [shape: f32[4,4], index: 2, kind: output, shape index: {}, may-alias: {1,2}]
  %s3 = sld [smem:[#allocation0]]
  $region26: #{step_fn.1} parent=0
    _
  %s5 = ssub.s32 1, %s3
  %s6 = scalar_select 0, %s5, %s3
  %7 = sst [smem:[#allocation2]] %s0
  // Predicated region
  $region2: #{step_fn.1} parent=0 // pred_check
    _
  $region3: #{step_fn.1} parent=0 // pred_check_branch
    %9 = sbr.rel (0) target = $region5
  $region4: #{step_fn.1} parent=0 // pred_region
    _
  $region5: #{step_fn.1} parent=0 // pred_fallthru
    _
  // Predicated region
  $region6: #{step_fn.1} parent=0 // pred_check
    _
  $region7: #{step_fn.1} parent=0 // pred_check_branch
    %11 = sbr.rel (0) target = $region9
  $region8: #{step_fn.1} parent=0 // pred_region
    _
  $region9: #{step_fn.1} parent=0 // pred_fallthru
    _
  %s12 = sld [smem:[#allocation2]]
  %v13 = vld [vmem:[%s1] sm:$0x1]
  %p14 = scmp.eq.s32.totalorder %s12, 0
  // Predicated region
  $region10: #{step_fn.1} parent=0 // pred_check
    %p15 = pneg %p14
  $region11: #{step_fn.1} parent=0 // pred_check_branch
    %17 = sbr.rel (%p15) target = $region13
  $region12: #{step_fn.1} parent=0 // pred_region
    %vm18 = vcmask 24576
    %v19 = vsel %vm18, %v13, 0.0
    %20 = vadd.xlane.f32.xlu0 %v19
    %v21 = vpop.xlane.xlu0 %20
    %22 = vst.msk [vmem:[%s2] sm:$0x1] %vm18, %v21
    %23 = vst.msk [vmem:[%s2 + $0x1] sm:$0x1] %vm18, %v13
    %24 = vst.msk [vmem:[%s2 + $0x2] sm:$0x1] %vm18, %v13
    %v25 = vld [vmem:[%s1 + $0x3] sm:$0x1]
    %26 = vst.msk [vmem:[%s2 + $0x3] sm:$0x1] %vm18, %v25
  $region13: #{step_fn.1} parent=0 // pred_fallthru
    _
  %p27 = scmp.ne.s32.totalorder %s12, 0
  // Predicated region
  $region14: #{step_fn.1} parent=0 // pred_check
    %p28 = pneg %p27
  $region15: #{step_fn.1} parent=0 // pred_check_branch
    %30 = sbr.rel (%p28) target = $region17
  $region16: #{step_fn.1} parent=0 // pred_region
    %v31 = vld [vmem:[%s1 + $0x1] sm:$0x1]
    %v32 = vld [vmem:[%s1 + $0x2] sm:$0x1]
    %v33 = vld [vmem:[%s1 + $0x3] sm:$0x1]
    %v34 = vadd.f32 %v32, 1e-08
    %v35 = vrcp.pop %v34
    %v36 = vadd.f32 %v31, 1e-08
    %v37 = vrcp.pop %v36
    %v38 = vmul.f32 %v13, %v35
    %v39 = vmul.f32 %v13, %v37
    %vm40 = vcmask 24576
    %v41 = vsel %vm40, %v38, -inf
    %42 = vmax.xlane.f32.xlu0 %v41
    %v43 = vpop.xlane.xlu0 %42
    %v44 = vsub.f32 %v38, %v43
    %v45 = vmul.f32 %v44, 1.442695
    %v46 = vpow.pop %v45
    %v47 = vsel %vm40, %v39, -inf
    %48 = vmax.xlane.f32.xlu0 %v47
    %v49 = vpop.xlane.xlu0 %48
    %v50 = vsub.f32 %v39, %v49
    %v51 = vmul.f32 %v50, 1.442695
    %v52 = vpow.pop %v51
    %v53 = vsel %vm40, %v46, 0.0
    %54 = vadd.xlane.f32.xlu0 %v53
    %v55 = vpop.xlane.xlu0 %54
    %v56 = vadd.f32 %v55, 1e-08
    %v57 = vrcp.pop %v56
    %v58 = vmul.f32 %v57, 4.0
    %v59 = vmul.f32 %v46, %v58
    %v60 = vsel %vm40, %v52, 0.0
    %61 = vadd.xlane.f32.xlu0 %v60
    %v62 = vpop.xlane.xlu0 %61
    %v63 = vadd.f32 %v62, 1e-08
    %v64 = vrcp.pop %v63
    %v65 = vmul.f32 %v64, 4.0
    %v66 = vmul.f32 %v52, %v65
    %s67 = sshrl.u32 %s12, 16
    %s68 = sxor.u32 %s12, %s67
    %s69 = smul.u32 %s68, 2246822507
    %s70 = sshrl.u32 %s69, 13
    %s71 = sxor.u32 %s69, %s70
    %s72 = smul.u32 %s71, 3266489909
    %s73 = sshrl.u32 %s72, 16
    %s74 = sxor.u32 %s72, %s73
    %s75 = sshrl.u32 %s74, 8
    %p76 = scmp.lt.s32.totalorder %s75, 16609444
    %s77 = scalar_select %p76, 1, 0
    %v78 = vstv %s77
    %vm79 = vcmp.eq.s32.totalorder %v78, 1
    %v80 = vsel %vm79, %v33, %v66
    %v81 = vmul.f32 %v80, 0.95
    %v82 = vmul.f32 %v59, 0.05
    %v83 = vadd.f32 %v81, %v82
    %v84 = vmul.f32 %v83, %v13
    %v85 = vsel %vm40, %v84, 0.0
    %86 = vadd.xlane.f32.xlu0 %v85
    %v87 = vpop.xlane.xlu0 %86
    %88 = vst.msk [vmem:[%s2] sm:$0x1] %vm40, %v87
    %89 = vst.msk [vmem:[%s2 + $0x1] sm:$0x1] %vm40, %v31
    %90 = vst.msk [vmem:[%s2 + $0x2] sm:$0x1] %vm40, %v13
    %91 = vst.msk [vmem:[%s2 + $0x3] sm:$0x1] %vm40, %v83
  $region17: #{step_fn.1} parent=0 // pred_fallthru
    _
  // Predicated region
  $region18: #{step_fn.1} parent=0 // pred_check
    _
  $region19: #{step_fn.1} parent=0 // pred_check_branch
    %93 = sbr.rel (0) target = $region21
  $region20: #{step_fn.1} parent=0 // pred_region
    _
  $region21: #{step_fn.1} parent=0 // pred_fallthru
    _
  // Predicated region
  $region22: #{step_fn.1} parent=0 // pred_check
    _
  $region23: #{step_fn.1} parent=0 // pred_check_branch
    %95 = sbr.rel (0) target = $region25
  $region24: #{step_fn.1} parent=0 // pred_region
    _
  $region25: #{step_fn.1} parent=0 // pred_fallthru
    _

</llo_original>
